<compile_context>
chip_gen: v7x
topology: tpu7x:2x2x1
jax: 0.10.0
libtpu: 0.0.40
codegen_flags: <defaults>
</compile_context>

<pallas_src>
import functools

import jax
import jax.numpy as jnp
from jax import lax
from jax.experimental import pallas as pl
from jax.experimental.pallas import tpu as pltpu


def _round_up(x, m):
    return (x + m - 1) // m * m


def _focal_kernel(x_ref, t_ref, a_ref, out_ref, *scratch, gamma, n_valid,
                  reduction, block_n, use_alpha, mask_tail):
    # x: (C_pad, block_n) logits, classes on sublanes, rows on lanes.
    x = x_ref[...].astype(jnp.float32)
    t = t_ref[...]                              # (1, block_n) int32

    # Class-axis (sublane) reductions -> lane-dense (1, block_n) results.
    m = jnp.max(x, axis=0, keepdims=True)
    lse = m + jnp.log(jnp.sum(jnp.exp(x - m), axis=0, keepdims=True))

    cls = lax.broadcasted_iota(jnp.int32, x.shape, 0)
    sel = cls == t                              # bool mask (no float one-hot)
    tgt = jnp.sum(jnp.where(sel, x, 0.0), axis=0, keepdims=True)

    ce = lse - tgt                              # cross_entropy(reduction='none')
    pt = jnp.exp(-ce)
    omp = 1.0 - pt

    if float(gamma) == int(gamma) and gamma >= 0:
        # integer gamma: plain VPU multiplies, no EUP pow
        g = int(gamma)
        mod = jnp.ones_like(omp)
        for _ in range(g):
            mod = mod * omp
    else:
        mod = omp ** jnp.float32(gamma)

    fl = mod * ce                               # (1, block_n)
    if use_alpha:
        a = a_ref[...]                          # (C_pad, 1) f32, resident
        alpha_t = jnp.sum(jnp.where(sel, a, 0.0), axis=0, keepdims=True)
        fl = alpha_t * fl

    if reduction == "none":
        out_ref[...] = fl                       # lane-dense store
    else:
        (acc_ref,) = scratch
        i = pl.program_id(0)
        if mask_tail:
            col = i * block_n + lax.broadcasted_iota(
                jnp.int32, (1, block_n), 1)
            fl = jnp.where(col < n_valid, fl, 0.0)

        @pl.when(i == 0)
        def _():
            acc_ref[...] = jnp.zeros_like(acc_ref)

        acc_ref[...] += fl                      # elementwise; no per-step XLU

        @pl.when(i == pl.num_programs(0) - 1)
        def _():
            total = jnp.sum(acc_ref[...], keepdims=True)   # single XLU reduce
            if reduction == "mean":
                total = total * (1.0 / jnp.float32(n_valid))
            out_ref[...] = total


def focal_loss(inputs, targets, *, alpha=None, gamma=2, reduction="mean",
               block_n=None, vmem_limit_bytes=32 * 1024 * 1024):
    """Pallas implementation of FocalLoss.forward.

    inputs : [N, C] float logits (any float dtype; streamed natively)
    targets: [N]    int class ids
    alpha  : optional [C] per-class weights
    """
    N, C = inputs.shape
    in_dtype = inputs.dtype
    assert jnp.issubdtype(in_dtype, jnp.floating), "logits must be float"
    assert reduction in ("mean", "sum", "none")

    C_pad = _round_up(C, 8)
    itemsize = jnp.dtype(in_dtype).itemsize

    if block_n is None:
        # Keep one logits tile <= ~4 MiB so the double-buffered pair stays
        # comfortably inside the 32 MiB scoped VMEM limit on every generation
        # (v7x has only 64 MiB physical VMEM).
        budget = 4 * 1024 * 1024
        block_n = max(128, min(2048, budget // (C_pad * itemsize) // 128 * 128))
    block_n = min(block_n, _round_up(N, 128))
    N_pad = _round_up(N, block_n)

    # [C, N] layout: classes on sublanes, rows on lanes.
    xt = inputs.T                                       # (C, N), native dtype
    if C_pad > C:
        xt = jnp.pad(xt, ((0, C_pad - C), (0, 0)),
                     constant_values=jnp.finfo(in_dtype).min)
    if N_pad > N:
        xt = jnp.pad(xt, ((0, 0), (0, N_pad - N)))

    t = targets.astype(jnp.int32).reshape(1, N)
    if N_pad > N:
        t = jnp.pad(t, ((0, 0), (0, N_pad - N)))

    use_alpha = alpha is not None
    if use_alpha:
        a = jnp.asarray(alpha, jnp.float32).reshape(C, 1)
        if C_pad > C:
            a = jnp.pad(a, ((0, C_pad - C), (0, 0)))
    else:
        a = jnp.zeros((C_pad, 1), jnp.float32)          # tiny, unused

    grid = (N_pad // block_n,)
    kernel = functools.partial(
        _focal_kernel, gamma=gamma, n_valid=N, reduction=reduction,
        block_n=block_n, use_alpha=use_alpha, mask_tail=(N_pad != N))

    in_specs = [
        pl.BlockSpec((C_pad, block_n), lambda i: (0, i)),   # logits tile
        pl.BlockSpec((1, block_n), lambda i: (0, i)),       # targets tile
        pl.BlockSpec((C_pad, 1), lambda i: (0, 0)),         # alpha (resident)
    ]

    if reduction == "none":
        out_shape = jax.ShapeDtypeStruct((1, N_pad), jnp.float32)
        out_specs = pl.BlockSpec((1, block_n), lambda i: (0, i))
        scratch_shapes = []
        dim_sem = ("parallel",)         # no carry; lets v7x shard over 2 TCs
    else:
        out_shape = jax.ShapeDtypeStruct((1, 1), jnp.float32)
        out_specs = pl.BlockSpec((1, 1), lambda i: (0, 0))
        scratch_shapes = [pltpu.VMEM((1, block_n), jnp.float32)]
        dim_sem = ("arbitrary",)        # resident vector accumulator
        # TODO(synk): v7x-only variant — emit lane-dense per-tile partial sums
        # with a "parallel" grid and finish the reduction in the wrapper to
        # use both TensorCores.

    out = pl.pallas_call(
        kernel,
        out_shape=out_shape,
        grid_spec=pltpu.PrefetchScalarGridSpec(
            num_scalar_prefetch=0,
            grid=grid,
            in_specs=in_specs,
            out_specs=out_specs,
            scratch_shapes=scratch_shapes,
        ),
        compiler_params=pltpu.CompilerParams(
            dimension_semantics=dim_sem,
            vmem_limit_bytes=vmem_limit_bytes),
    )(xt, t, a)

    if reduction == "none":
        return out.reshape(N_pad)[:N]
    return out.reshape(())


def _reference(inputs, targets, alpha=None, gamma=2, reduction="mean"):
    logp = jax.nn.log_softmax(inputs.astype(jnp.float32), axis=-1)
    ce = -jnp.take_along_axis(logp, targets[:, None], axis=-1)[:, 0]
    pt = jnp.exp(-ce)
    fl = (1.0 - pt) ** gamma * ce
    if alpha is not None:
        fl = jnp.asarray(alpha, jnp.float32)[targets] * fl
    if reduction == "mean":
        return fl.mean()
    if reduction == "sum":
        return fl.sum()
    return fl


if __name__ == "__main__":
    key = jax.random.PRNGKey(0)
    k1, k2, k3 = jax.random.split(key, 3)

    # Deliberately not multiples of 8/128 to exercise padding + tail masking.
    N, C = 50, 10
    inputs = jax.random.normal(k1, (N, C), jnp.float32)
    targets = jax.random.randint(k2, (N,), 0, C, jnp.int32)
    alpha = jax.random.uniform(k3, (C,), jnp.float32) + 0.5

    # default module config: alpha=None, gamma=2, reduction='mean'
    out_mean = focal_loss(inputs, targets)
    jax.block_until_ready(out_mean)

    # other paths: alpha, sum, none, float gamma, bf16 streaming
    out_alpha = focal_loss(inputs, targets, alpha=alpha)
    out_sum = focal_loss(inputs, targets, reduction="sum")
    out_none = focal_loss(inputs, targets, reduction="none")
    out_g = focal_loss(inputs, targets, gamma=1.5)
    out_bf16 = focal_loss(inputs.astype(jnp.bfloat16), targets)
    jax.block_until_ready((out_alpha, out_sum, out_none, out_g, out_bf16))

    assert jnp.allclose(out_mean, _reference(inputs, targets), atol=1e-5)
    assert jnp.allclose(out_alpha, _reference(inputs, targets, alpha=alpha),
                        atol=1e-5)
    assert jnp.allclose(out_sum, _reference(inputs, targets, reduction="sum"),
                        atol=1e-4)
    assert jnp.allclose(out_none, _reference(inputs, targets, reduction="none"),
                        atol=1e-5)
    assert jnp.allclose(out_g, _reference(inputs, targets, gamma=1.5),
                        atol=1e-4)
    assert jnp.allclose(out_bf16,
                        _reference(inputs.astype(jnp.bfloat16), targets),
                        atol=1e-4)

    print("KERNEL_OK")
</pallas_src>

<mosaic_0001>
module attributes {stable_mosaic.version = 11 : i64} {
  func.func @_focal_kernel(%arg0: i32, %arg1: memref<16x128xf32, #tpu.memory_space<vmem>>, %arg2: memref<1x128xi32, #tpu.memory_space<vmem>>, %arg3: memref<16x1xf32, #tpu.memory_space<vmem>>, %arg4: memref<1x1xf32, #tpu.memory_space<vmem>>, %arg5: memref<1x128xf32, #tpu.memory_space<vmem>>) attributes {dimension_semantics = [#tpu.dimension_semantics<arbitrary>], iteration_bounds = array<i64: 1>, scalar_prefetch = 0 : i64, scratch_operands = 1 : i64, tpu.core_type = #tpu.core_type<tc>, window_params = [{transform_indices = @transform_0, window_bounds = array<i64: 16, 128>}, {transform_indices = @transform_1, window_bounds = array<i64: 1, 128>}, {pipeline_mode = #tpu.pipeline_mode<synchronous>, transform_indices = @transform_2, window_bounds = array<i64: 16, 1>}, {pipeline_mode = #tpu.pipeline_mode<synchronous>, transform_indices = @transform_3, window_bounds = array<i64: 1, 1>}]} {
    %c0 = arith.constant 0 : index
    %c0_0 = arith.constant 0 : index
    %0 = vector.load %arg1[%c0, %c0_0] : memref<16x128xf32, #tpu.memory_space<vmem>>, vector<16x128xf32>
    %c0_1 = arith.constant 0 : index
    %c0_2 = arith.constant 0 : index
    %1 = vector.load %arg2[%c0_1, %c0_2] : memref<1x128xi32, #tpu.memory_space<vmem>>, vector<1x128xi32>
    %cst = arith.constant dense<0xFF800000> : vector<128xf32>
    %2 = vector.multi_reduction <maximumf>, %0, %cst [0] : vector<16x128xf32> to vector<128xf32>
    %3 = vector.shape_cast %2 : vector<128xf32> to vector<1x128xf32>
    %4 = vector.broadcast %3 : vector<1x128xf32> to vector<16x128xf32>
    %5 = arith.subf %0, %4 : vector<16x128xf32>
    %6 = math.exp %5 : vector<16x128xf32>
    %cst_3 = arith.constant dense<0.000000e+00> : vector<128xf32>
    %7 = vector.multi_reduction <add>, %6, %cst_3 [0] : vector<16x128xf32> to vector<128xf32>
    %8 = vector.shape_cast %7 : vector<128xf32> to vector<1x128xf32>
    %9 = math.log %8 : vector<1x128xf32>
    %10 = arith.addf %3, %9 : vector<1x128xf32>
    %11 = tpu.iota {dimensions = array<i32: 0>} : vector<16x128xi32>
    %12 = vector.broadcast %1 : vector<1x128xi32> to vector<16x128xi32>
    %13 = arith.cmpi eq, %11, %12 : vector<16x128xi32>
    %cst_4 = arith.constant 0.000000e+00 : f32
    %14 = vector.broadcast %cst_4 : f32 to vector<16x128xf32>
    %15 = arith.select %13, %0, %14 : vector<16x128xi1>, vector<16x128xf32>
    %cst_5 = arith.constant dense<0.000000e+00> : vector<128xf32>
    %16 = vector.multi_reduction <add>, %15, %cst_5 [0] : vector<16x128xf32> to vector<128xf32>
    %17 = vector.shape_cast %16 : vector<128xf32> to vector<1x128xf32>
    %18 = arith.subf %10, %17 : vector<1x128xf32>
    %cst_6 = arith.constant 0.000000e+00 : f32
    %19 = vector.broadcast %cst_6 : f32 to vector<1x128xf32>
    %20 = arith.subf %19, %18 : vector<1x128xf32>
    %21 = math.exp %20 : vector<1x128xf32>
    %cst_7 = arith.constant 1.000000e+00 : f32
    %22 = vector.broadcast %cst_7 : f32 to vector<1x128xf32>
    %23 = arith.subf %22, %21 : vector<1x128xf32>
    %cst_8 = arith.constant 1.000000e+00 : f32
    %24 = vector.broadcast %cst_8 : f32 to vector<1x128xf32>
    %25 = arith.mulf %24, %23 : vector<1x128xf32>
    %26 = arith.mulf %25, %23 : vector<1x128xf32>
    %27 = arith.mulf %26, %18 : vector<1x128xf32>
    %c128_i32 = arith.constant 128 : i32
    %28 = arith.muli %arg0, %c128_i32 : i32
    %29 = tpu.iota {dimensions = array<i32: 1>} : vector<1x128xi32>
    %30 = vector.broadcast %28 : i32 to vector<1x128xi32>
    %31 = arith.addi %30, %29 : vector<1x128xi32>
    %c50_i32 = arith.constant 50 : i32
    %32 = vector.broadcast %c50_i32 : i32 to vector<1x128xi32>
    %33 = arith.cmpi slt, %31, %32 : vector<1x128xi32>
    %cst_9 = arith.constant 0.000000e+00 : f32
    %34 = vector.broadcast %cst_9 : f32 to vector<1x128xf32>
    %35 = arith.select %33, %27, %34 : vector<1x128xi1>, vector<1x128xf32>
    %c0_i32 = arith.constant 0 : i32
    %36 = arith.cmpi eq, %arg0, %c0_i32 : i32
    %37 = arith.extui %36 : i1 to i32
    %c0_i32_10 = arith.constant 0 : i32
    %38 = arith.cmpi ne, %37, %c0_i32_10 : i32
    scf.if %38 {
      %cst_17 = arith.constant 0.000000e+00 : f32
      %45 = vector.broadcast %cst_17 : f32 to vector<1x128xf32>
      %c0_18 = arith.constant 0 : index
      %c0_19 = arith.constant 0 : index
      %46 = vector.load %arg5[%c0_18, %c0_19] : memref<1x128xf32, #tpu.memory_space<vmem>>, vector<1x128xf32>
      tpu.vector_store %arg5[%c0_18, %c0_19], %45 {strides = array<i32>} : memref<1x128xf32, #tpu.memory_space<vmem>>, vector<1x128xf32>,
    } else {
    }
    %c0_11 = arith.constant 0 : index
    %c0_12 = arith.constant 0 : index
    %39 = vector.load %arg5[%c0_11, %c0_12] : memref<1x128xf32, #tpu.memory_space<vmem>>, vector<1x128xf32>
    %40 = arith.addf %39, %35 : vector<1x128xf32>
    %c0_13 = arith.constant 0 : index
    %c0_14 = arith.constant 0 : index
    %41 = vector.load %arg5[%c0_13, %c0_14] : memref<1x128xf32, #tpu.memory_space<vmem>>, vector<1x128xf32>
    tpu.vector_store %arg5[%c0_13, %c0_14], %40 {strides = array<i32>} : memref<1x128xf32, #tpu.memory_space<vmem>>, vector<1x128xf32>,
    %c0_i32_15 = arith.constant 0 : i32
    %42 = arith.cmpi eq, %arg0, %c0_i32_15 : i32
    %43 = arith.extui %42 : i1 to i32
    %c0_i32_16 = arith.constant 0 : i32
    %44 = arith.cmpi ne, %43, %c0_i32_16 : i32
    scf.if %44 {
      %c0_17 = arith.constant 0 : index
      %c0_18 = arith.constant 0 : index
      %45 = vector.load %arg5[%c0_17, %c0_18] : memref<1x128xf32, #tpu.memory_space<vmem>>, vector<1x128xf32>
      %46 = vector.shape_cast %45 : vector<1x128xf32> to vector<1x1x128xf32>
      %cst_19 = arith.constant dense<0.000000e+00> : vector<1xf32>
      %47 = vector.multi_reduction <add>, %46, %cst_19 [1, 2] : vector<1x1x128xf32> to vector<1xf32>
      %48 = vector.shape_cast %47 : vector<1xf32> to vector<1x1x1xf32>
      %49 = vector.extract %48[0, 0, 0] : f32 from vector<1x1x1xf32>
      %50 = vector.broadcast %49 : f32 to vector<1x1xf32>
      %cst_20 = arith.constant 1.000000e+00 : f32
      %cst_21 = arith.constant 5.000000e+01 : f32
      %51 = arith.divf %cst_20, %cst_21 : f32
      %52 = vector.broadcast %51 : f32 to vector<1x1xf32>
      %53 = arith.mulf %50, %52 : vector<1x1xf32>
      %c0_22 = arith.constant 0 : index
      %c0_23 = arith.constant 0 : index
      %54 = vector.load %arg4[%c0_22, %c0_23] : memref<1x1xf32, #tpu.memory_space<vmem>>, vector<1x1xf32>
      tpu.vector_store %arg4[%c0_22, %c0_23], %53 {strides = array<i32>} : memref<1x1xf32, #tpu.memory_space<vmem>>, vector<1x1xf32>,
    } else {
    }
    return
  }
  func.func @transform_0(%arg0: i32) -> (i32, i32) {
    %c0_i32 = arith.constant 0 : i32
    %c0_i32_0 = arith.constant 0 : i32
    return %c0_i32, %arg0 : i32, i32
  }
  func.func @transform_1(%arg0: i32) -> (i32, i32) {
    %c0_i32 = arith.constant 0 : i32
    %c0_i32_0 = arith.constant 0 : i32
    return %c0_i32, %arg0 : i32, i32
  }
  func.func @transform_2(%arg0: i32) -> (i32, i32) {
    %c0_i32 = arith.constant 0 : i32
    %c0_i32_0 = arith.constant 0 : i32
    %c0_i32_1 = arith.constant 0 : i32
    return %c0_i32, %c0_i32_0 : i32, i32
  }
  func.func @transform_3(%arg0: i32) -> (i32, i32) {
    %c0_i32 = arith.constant 0 : i32
    %c0_i32_0 = arith.constant 0 : i32
    %c0_i32_1 = arith.constant 0 : i32
    return %c0_i32, %c0_i32_0 : i32, i32
  }
}

</mosaic_0001>

<llo_original>
// kernel: tpu_custom_call.1
$region0: #{tpu_custom_call.1}
  #allocation0 [shape = 'u32[]', space=smem, size = 0x4, offset = 0x4, fixed_abs, tag = 'smem constant byte address 0x4 - core index']
  #allocation1 [shape = 'u32[144,128]{1,0:T(1,128)}', space=vmem, size = 0x12000, scoped, tag = 'internal scratch']
  #allocation2 [shape = 'f32[1,128]{1,0:T(1,128)}', space=vmem, size = 0x200, scoped, tag = 'scratch operand']
  %s0 = inlined_call_operand.vmem [shape: f32[16,128], index: 0, kind: input, shape index: {}]
  %s1 = inlined_call_operand.vmem [shape: s32[1,128], index: 1, kind: input, shape index: {}]
  %s2 = inlined_call_operand.vmem [shape: f32[16,1], index: 2, kind: input, shape index: {}]
  %s3 = inlined_call_operand.hbm [shape: f32[1,1], index: 3, kind: output, shape index: {}]
  %s4 = sld [smem:[#allocation0]]
  $region30: #{tpu_custom_call.1} parent=0
    _
  %s6 = ssub.s32 1, %s4
  %s7 = scalar_select 0, %s6, %s4
  $region1: #{tpu_custom_call.1} parent=0
    #allocation3 [shape = 'u8[512]{0}', space=vmem, size = 0x400, scoped, tag = 'output window, operand 0, single buffered']
    #allocation4 [shape = 's32[1]{0}', space=sflag, size = 0x4, scoped, tag = 'scoped memory for tpu_custom_call.1']
    %8 = vsyncpa [#allocation4], 0
    // Predicated region
    $region2: #{tpu_custom_call.1} parent=1 // pred_check
      _
    $region3: #{tpu_custom_call.1} parent=1 // pred_check_branch
      %10 = sbr.rel (0) target = $region5
    $region4: #{tpu_custom_call.1} parent=1 // pred_region
      _
    $region5: #{tpu_custom_call.1} parent=1 // pred_fallthru
      _
    // Predicated region
    $region6: #{tpu_custom_call.1} parent=1 // pred_check
      _
    $region7: #{tpu_custom_call.1} parent=1 // pred_check_branch
      %12 = sbr.rel (0) target = $region9
    $region8: #{tpu_custom_call.1} parent=1 // pred_region
      _
    $region9: #{tpu_custom_call.1} parent=1 // pred_fallthru
      _
    // Predicated region
    $region10: #{tpu_custom_call.1} parent=1 // pred_check
      _
    $region11: #{tpu_custom_call.1} parent=1 // pred_check_branch
      %14 = sbr.rel (0) target = $region13
    $region12: #{tpu_custom_call.1} parent=1 // pred_region
      _
    $region13: #{tpu_custom_call.1} parent=1 // pred_fallthru
      _
    %v15 = vld [vmem:[%s0] sm:$0xff]
    %v16 = vld [vmem:[%s0 + $0x8] sm:$0xff]
    %v17 = vld [vmem:[%s1] sm:$0x1]
    %v18 = vmax.f32 %v15, %v16
    %v19 = vrot.slane %v18, 4
    %v20 = vmax.f32 %v18, %v19
    %v21 = vrot.slane %v20, 2
    %v22 = vmax.f32 %v20, %v21
    %v23 = vrot.slane %v22, 1
    %v24 = vmax.f32 %v22, %v23
    %v25 = vsub.f32 %v15, %v24
    %v26 = vsub.f32 %v16, %v24
    %v27 = vmul.f32 %v25, 1.442695
    %v28 = vpow.pop %v27
    %v29 = vmul.f32 %v26, 1.442695
    %v30 = vpow.pop %v29
    %v31 = vadd.f32 %v28, %v30
    %v32 = vrot.slane %v31, 4
    %v33 = vadd.f32 %v31, %v32
    %v34 = vrot.slane %v33, 2
    %v35 = vadd.f32 %v33, %v34
    %v36 = vrot.slane %v35, 1
    %v37 = vadd.f32 %v35, %v36
    %v38 = vlog2.pop %v37
    %v39 = vmul.f32 %v38, 0.6931472
    %v40 = vadd.f32 %v24, %v39
    %v41 = vlaneseq
    %v42 = vshrl.u32 %v41, 7
    %v43 = vadd.s32 %v42, 8
    %v44 = vlaneseq
    %v45 = vshrl.u32 %v44, 7
    %v46 = vsub.s32 0, %v45
    %v47 = vrot.slane %v17, %v46
    %vm48 = vcmp.eq.s32.totalorder %v42, %v47
    %vm49 = vcmp.eq.s32.totalorder %v43, %v47
    %v50 = vsel %vm48, %v15, 0.0
    %v51 = vsel %vm49, %v16, 0.0
    %v52 = vadd.f32 %v50, %v51
    %v53 = vrot.slane %v52, 4
    %v54 = vadd.f32 %v52, %v53
    %v55 = vrot.slane %v54, 2
    %v56 = vadd.f32 %v54, %v55
    %v57 = vrot.slane %v56, 1
    %v58 = vadd.f32 %v56, %v57
    %v59 = vsub.f32 %v40, %v58
    %v60 = vsub.f32 0.0, %v59
    %v61 = vmul.f32 %v60, 1.442695
    %v62 = vpow.pop %v61
    %v63 = vsub.f32 1.0, %v62
    %v64 = vmul.f32 %v63, %v63
    %v65 = vmul.f32 %v64, %v59
    %s66 = smul.u32 0, 128
    %v67 = vlaneseq
    %v68 = vand.u32 %v67, 127
    %v69 = vstv %s66
    %v70 = vadd.s32 %v69, %v68
    %vm71 = vcmp.lt.s32.totalorder %v70, 50
    %v72 = vsel %vm71, %v65, 0.0
    %p73 = scmp.eq.s32.totalorder 0, 0
    // Predicated region
    $region14: #{tpu_custom_call.1} parent=1 // pred_check
      %p74 = pneg %p73
    $region15: #{tpu_custom_call.1} parent=1 // pred_check_branch
      %76 = sbr.rel (%p74) target = $region17
    $region16: #{tpu_custom_call.1} parent=1 // pred_region
      %77 = vst [vmem:[#allocation2] sm:$0x1] 0.0
    $region17: #{tpu_custom_call.1} parent=1 // pred_fallthru
      _
    %v78 = vld [vmem:[#allocation2] sm:$0x1]
    %v79 = vadd.f32 %v78, %v72
    %80 = vst [vmem:[#allocation2] sm:$0x1] %v79
    // Predicated region
    $region18: #{tpu_custom_call.1} parent=1 // pred_check
      %p81 = pneg %p73
    $region19: #{tpu_custom_call.1} parent=1 // pred_check_branch
      %83 = sbr.rel (%p81) target = $region21
    $region20: #{tpu_custom_call.1} parent=1 // pred_region
      %v84 = vld [vmem:[#allocation2] sm:$0x1]
      %vm85 = vcmask 1040384
      %v86 = vsel %vm85, %v84, 0.0
      %87 = vadd.xlane.f32.xlu0 %v86
      %v88 = vpop.xlane.xlu0 %87
      %v89 = vrot.slane %v88, 4
      %v90 = vadd.f32 %v88, %v89
      %v91 = vrot.slane %v90, 2
      %v92 = vadd.f32 %v90, %v91
      %v93 = vrot.slane %v92, 1
      %v94 = vadd.f32 %v92, %v93
      %s95 = vtos %v94
      %v96 = vstv %s95
      %v97 = vmul.f32 %v96, 0.02
      %vm98 = vcmask 0
      %99 = vst.msk [vmem:[#allocation3] sm:$0x1] %vm98, %v97
    $region21: #{tpu_custom_call.1} parent=1 // pred_fallthru
      _
    // Predicated region
    $region22: #{tpu_custom_call.1} parent=1 // pred_check
      _
    $region23: #{tpu_custom_call.1} parent=1 // pred_check_branch
      %101 = sbr.rel (0) target = $region25
    $region24: #{tpu_custom_call.1} parent=1 // pred_region
      %s103 = ssub.s32 16, 16
      %104 = vsyncadd [#allocation4], %s103
      %s106 = sshll.u32 [#allocation3], 4
      %s107 = int_to_ptr.vmem [resolvable:$true] %s106
      %109 = dma.vmem_to_hbm [thread:$0]  %s107, 16, %s3, [#allocation4]
    $region25: #{tpu_custom_call.1} parent=1 // pred_fallthru
      _
    // Predicated region
    $region26: #{tpu_custom_call.1} parent=1 // pred_check
      _
    $region27: #{tpu_custom_call.1} parent=1 // pred_check_branch
      %111 = sbr.rel (0) target = $region29
    $region28: #{tpu_custom_call.1} parent=1 // pred_region
      %112 = dma.done [#allocation4], 16
    $region29: #{tpu_custom_call.1} parent=1 // pred_fallthru
      _
    %113 = vsyncpa [#allocation4], 1

</llo_original>
